<compile_context>
chip_gen: v7x
topology: tpu7x:2x2x1
jax: 0.10.0
libtpu: 0.0.40
codegen_flags: <defaults>
</compile_context>

<pallas_src>
import functools
import numpy as np
import jax
import jax.numpy as jnp
from jax.experimental import pallas as pl
from jax.experimental.pallas import tpu as pltpu


# ----------------------------------------------------------------------------
# Host-side setup: PIL-style bicubic resampling matrices (deterministic, no I/O)
# ----------------------------------------------------------------------------
def _bicubic_filter(x, a=-0.5):
    x = np.abs(x)
    return np.where(
        x < 1.0,
        ((a + 2.0) * x - (a + 3.0)) * x * x + 1.0,
        np.where(x < 2.0, (((x - 5.0) * x + 8.0) * x - 4.0) * a, 0.0),
    )


def _pil_bicubic_matrix(in_size, out_size):
    """(out_size, in_size) resampling matrix matching PIL's BICUBIC resize
    (support scaled by the downscale factor, weights normalized per row)."""
    scale = in_size / out_size
    filterscale = max(scale, 1.0)
    support = 2.0 * filterscale
    W = np.zeros((out_size, in_size), dtype=np.float64)
    for i in range(out_size):
        center = (i + 0.5) * scale
        xmin = int(max(center - support + 0.5, 0))
        xmax = int(min(center + support + 0.5, in_size))
        xs = np.arange(xmin, xmax, dtype=np.float64)
        w = _bicubic_filter((xs + 0.5 - center) / filterscale)
        s = w.sum()
        if s != 0.0:
            w = w / s
        W[i, xmin:xmax] = w
    return W.astype(np.float32)


def _cdiv(a, b):
    return -(-a // b)


def _compiler_kwargs(vmem_estimate_bytes, dimension_semantics):
    """Generation-aware compiler params; only raise the scoped VMEM limit if needed."""
    kwargs = dict(dimension_semantics=dimension_semantics)
    if vmem_estimate_bytes > (16 << 20):          # smallest default scoped limit (v5e)
        try:
            cap = int(pltpu.get_tpu_info().vmem_capacity_bytes)   # 128 MiB v5e/v6e, 64 MiB v7x
        except Exception:
            cap = 64 << 20
        # leave headroom for Mosaic internal scratch / semaphores (matters most on v7x)
        kwargs["vmem_limit_bytes"] = int(min(vmem_estimate_bytes + (4 << 20), int(cap * 0.85)))
    return kwargs


# ----------------------------------------------------------------------------
# Resize + pad kernel: per-channel grid, two MXU matmuls, f32 accumulator,
# padding folded into the weights, lane-dense full-block store.
# ----------------------------------------------------------------------------
def _resize_pad_kernel(img_ref, wh_ref, wwt_ref, out_ref, acc_ref, *,
                       float_output, h_first, compute_dtype):
    k = pl.program_id(2)

    @pl.when(k == 0)
    def _init():
        acc_ref[...] = jnp.zeros_like(acc_ref)

    img = img_ref[...]                               # (H_in, TILE_K)
    if jnp.issubdtype(img.dtype, jnp.integer):
        img = img.astype(jnp.int32).astype(jnp.float32)
    img = img.astype(compute_dtype)
    wh = wh_ref[...]                                 # (TILE_M, H_in)   pad rows folded in
    wwt = wwt_ref[...]                               # (TILE_K, new_w)  pad cols folded in (pre-T)

    if h_first:   # rows first, then columns (always used when tiled)
        tmp = jnp.dot(wh, img, preferred_element_type=jnp.float32)            # (TILE_M, TILE_K)
        acc_ref[...] += jnp.dot(tmp.astype(compute_dtype), wwt,
                                preferred_element_type=jnp.float32)
    else:         # columns first, then rows (untiled only)
        tmp = jnp.dot(img, wwt, preferred_element_type=jnp.float32)           # (H_in, new_w)
        acc_ref[...] += jnp.dot(wh, tmp.astype(compute_dtype),
                                preferred_element_type=jnp.float32)

    @pl.when(k == pl.num_programs(2) - 1)
    def _finalize():
        res = jnp.clip(acc_ref[...], 0.0, 255.0)     # resize_single_channel's clip(0, 255)
        if float_output:
            out_ref[...] = res.astype(out_ref.dtype)
        else:
            # np.uint8(np.rint(...)); values already in [0,255] -> no second clip.
            # f32 -> i32 -> u8 kept as the guaranteed Mosaic lowering path.
            out_ref[...] = jnp.round(res).astype(jnp.int32).astype(jnp.uint8)


def _resize_pad(image_bhwc, new_h, new_w, h_r, w_r, float_output, use_bf16):
    B, H_in, W_in, C = image_bhwc.shape
    compute_dtype = jnp.bfloat16 if use_bf16 else jnp.float32
    out_dtype = jnp.float32 if float_output else jnp.uint8

    # PIL-BICUBIC separable resampling matrices with centered zero padding folded in.
    top = (new_h - h_r) // 2
    left = (new_w - w_r) // 2
    wh_pad = np.zeros((new_h, H_in), dtype=np.float32)
    wh_pad[top:top + h_r, :] = _pil_bicubic_matrix(H_in, h_r)
    wwt_pad = np.zeros((W_in, new_w), dtype=np.float32)          # pre-transposed column weight
    wwt_pad[:, left:left + w_r] = _pil_bicubic_matrix(W_in, w_r).T

    in_b = np.dtype(image_bhwc.dtype).itemsize
    cb = np.dtype(compute_dtype).itemsize
    out_b = np.dtype(out_dtype).itemsize

    # Contraction order (per-channel FLOPs); tiling forces rows-first.
    flops_h_first = new_h * H_in * W_in + new_h * W_in * new_w
    flops_w_first = H_in * W_in * new_w + new_h * H_in * new_w
    h_first = flops_h_first <= flops_w_first

    def vmem_est(tile_m, tile_k, hf):
        img_blk = H_in * tile_k * (2 * in_b + 4 + cb)            # 2 pipeline bufs + in-kernel copies
        wh_blk = tile_m * H_in * cb * 2
        wwt_blk = tile_k * new_w * cb * 2
        out_blk = tile_m * new_w * out_b * 2
        acc = tile_m * new_w * 4
        tmp = (tile_m * tile_k if hf else H_in * new_w) * (4 + cb)
        return img_blk + wh_blk + wwt_blk + out_blk + acc + tmp

    VMEM_BUDGET = 24 << 20                            # fits every generation (v7x: 64 MiB/TC)
    tile_m = new_h if new_h <= 512 else 256           # parallel row tiles (multiple of 8)
    tile_k = W_in                                     # reduction tiles over W_in
    if vmem_est(tile_m, tile_k, h_first) > VMEM_BUDGET and W_in > 512:
        tile_k = 512                                  # multiple of 128 (lane-dense K tiles)
    m_tiles = _cdiv(new_h, tile_m)
    k_tiles = _cdiv(W_in, tile_k)
    if m_tiles > 1 or k_tiles > 1:
        h_first = True                                # avoid redoing a matmul per tile
    # TODO(synk): extremely tall frames (huge H_in) would additionally need tiling of H_in.

    # (B, H, W, C) -> (B*C, H, W): one cheap layout pass so every channel shares the
    # plain (W_in, new_w) column weight (no kron / C^2 weight blow-up).
    img_chw = jnp.transpose(image_bhwc, (0, 3, 1, 2)).reshape(B * C, H_in, W_in)
    if k_tiles * tile_k != W_in:                      # pad so reduction tiles divide evenly
        w_total = k_tiles * tile_k
        img_chw = jnp.pad(img_chw, ((0, 0), (0, 0), (0, w_total - W_in)))
        wwt_pad = np.pad(wwt_pad, ((0, w_total - W_in), (0, 0)))

    wh_dev = jnp.asarray(wh_pad, dtype=compute_dtype)
    wwt_dev = jnp.asarray(wwt_pad, dtype=compute_dtype)

    compiler_kwargs = _compiler_kwargs(vmem_est(tile_m, tile_k, h_first),
                                       ("parallel", "parallel", "arbitrary"))
    kernel = functools.partial(_resize_pad_kernel, float_output=float_output,
                               h_first=h_first, compute_dtype=compute_dtype)

    out = pl.pallas_call(
        kernel,
        out_shape=jax.ShapeDtypeStruct((B * C, new_h, new_w), out_dtype),
        grid_spec=pltpu.PrefetchScalarGridSpec(
            num_scalar_prefetch=0,
            grid=(B * C, m_tiles, k_tiles),
            in_specs=[
                pl.BlockSpec((None, H_in, tile_k), lambda g, m, k: (g, 0, k)),
                pl.BlockSpec((tile_m, H_in), lambda g, m, k: (m, 0)),   # weights stay resident
                pl.BlockSpec((tile_k, new_w), lambda g, m, k: (k, 0)),
            ],
            out_specs=pl.BlockSpec((None, tile_m, new_w), lambda g, m, k: (g, m, 0)),
            scratch_shapes=[pltpu.VMEM((tile_m, new_w), jnp.float32)],
        ),
        compiler_params=pltpu.CompilerParams(**compiler_kwargs),
    )(img_chw, wh_dev, wwt_dev)

    out = out.reshape(B, C, new_h, new_w)
    return jnp.transpose(out, (0, 2, 3, 1))


# ----------------------------------------------------------------------------
# Pad-only kernel (ratio_w > 1 and ratio_h > 1): no matmuls, bandwidth-only.
# ----------------------------------------------------------------------------
def _pad_only_kernel(img_ref, out_ref, canvas_ref, *, top, float_output):
    h = img_ref.shape[0]
    img = img_ref[...]
    if jnp.issubdtype(img.dtype, jnp.integer):
        img = img.astype(jnp.int32)
    canvas_ref[...] = jnp.zeros_like(canvas_ref)
    canvas_ref[top:top + h, :] = img.astype(jnp.float32)   # centered rows (sublane offset only)
    res = canvas_ref[...]
    if float_output:
        if jnp.issubdtype(out_ref.dtype, jnp.integer):
            out_ref[...] = res.astype(jnp.int32).astype(out_ref.dtype)
        else:
            out_ref[...] = res.astype(out_ref.dtype)
    else:
        out_ref[...] = jnp.clip(jnp.round(res), 0.0, 255.0).astype(jnp.int32).astype(jnp.uint8)


def _pad_only(image_bhwc, new_h, new_w, float_output):
    B, H, W, C = image_bhwc.shape
    delta_h, delta_w = new_h - H, new_w - W
    top = delta_h // 2
    left, right = delta_w // 2, delta_w - delta_w // 2
    out_dtype = image_bhwc.dtype if float_output else jnp.uint8

    # Column (lane) padding is one bandwidth-only XLA pad so the kernel only ever does
    # full-lane-width stores at a sublane (row) offset.
    img_w = jnp.pad(image_bhwc, ((0, 0), (0, 0), (left, right), (0, 0)))
    img3 = img_w.reshape(B, H, new_w * C)                 # free HWC view

    in_b = np.dtype(image_bhwc.dtype).itemsize
    out_b = np.dtype(out_dtype).itemsize
    est = (H * new_w * C * (2 * in_b + 4)
           + new_h * new_w * C * (2 * out_b + 4 + 4))
    kernel = functools.partial(_pad_only_kernel, top=top, float_output=float_output)

    out3 = pl.pallas_call(
        kernel,
        out_shape=jax.ShapeDtypeStruct((B, new_h, new_w * C), out_dtype),
        grid_spec=pltpu.PrefetchScalarGridSpec(
            num_scalar_prefetch=0,
            grid=(B,),
            in_specs=[pl.BlockSpec((None, H, new_w * C), lambda b: (b, 0, 0))],
            out_specs=pl.BlockSpec((None, new_h, new_w * C), lambda b: (b, 0, 0)),
            scratch_shapes=[pltpu.VMEM((new_h, new_w * C), jnp.float32)],
        ),
        compiler_params=pltpu.CompilerParams(**_compiler_kwargs(est, ("parallel",))),
    )(img3)
    return out3.reshape(B, new_h, new_w, C)


# ----------------------------------------------------------------------------
# Wrapper reproducing ResizeWithPad.resize_with_pad
# ----------------------------------------------------------------------------
def resize_with_pad(image, new_shape, float_output=False, use_bf16=True):
    """image: (H, W, C) or batched (B, H, W, C). new_shape: (new_W, new_H), as in the module."""
    image = jnp.asarray(image)
    batched = image.ndim == 4
    if not batched:
        image = image[None]
    _, H_in, W_in, _ = image.shape
    new_w, new_h = int(new_shape[0]), int(new_shape[1])

    ratio_width = float(new_w) / W_in
    ratio_height = float(new_h) / H_in
    ratio = min(ratio_width, ratio_height)

    if ratio_width > 1 and ratio_height > 1:
        out = _pad_only(image, new_h, new_w, float_output)      # no resize: copy + pad only
    else:
        w_r = round(W_in * ratio)
        h_r = round(H_in * ratio)
        out = _resize_pad(image, new_h, new_w, h_r, w_r, float_output, use_bf16)
    # TODO(synk): PIL.Image.fromarray wrapping has no Pallas/JAX equivalent; arrays are returned.
    return out if batched else out[0]


# ----------------------------------------------------------------------------
# NumPy reference (same matrices) for validation
# ----------------------------------------------------------------------------
def _numpy_reference(img_np, new_shape, float_output):
    H, W, C = img_np.shape
    new_w, new_h = int(new_shape[0]), int(new_shape[1])
    rw, rh = float(new_w) / W, float(new_h) / H
    r = min(rw, rh)
    if rw > 1 and rh > 1:
        res = img_np
        dw, dh = new_w - W, new_h - H
    else:
        w_r, h_r = round(W * r), round(H * r)
        wh = _pil_bicubic_matrix(H, h_r)
        ww = _pil_bicubic_matrix(W, w_r)
        x = img_np.astype(np.float32)
        res = np.einsum('hH,HWc->hWc', wh, x)
        res = np.einsum('wW,hWc->hwc', ww, res)
        res = res.clip(0.0, 255.0).astype(np.float32)
        dw, dh = new_w - w_r, new_h - h_r
    top, bottom = dh // 2, dh - dh // 2
    left, right = dw // 2, dw - dw // 2
    out = np.pad(res, ((top, bottom), (left, right), (0, 0)), mode='constant')
    if not float_output:
        out = np.uint8(np.rint(out.clip(0.0, 255.0)))
    return out


if __name__ == "__main__":
    key = jax.random.PRNGKey(0)
    # Small deterministic uint8-range image: H=24, W=32, C=4 ; target new_shape=(W=16, H=16)
    img = jnp.round(jax.random.uniform(key, (24, 32, 4), minval=0.0, maxval=255.0))
    img_np = np.asarray(img)

    # 1) Downscale + centered pad, bicubic, uint8 output; f32 path vs NumPy reference.
    out_f32 = jax.block_until_ready(resize_with_pad(img, (16, 16), float_output=False,
                                                    use_bf16=False))
    ref = _numpy_reference(img_np, (16, 16), float_output=False)
    assert out_f32.shape == (16, 16, 4) and out_f32.dtype == jnp.uint8
    assert int(np.max(np.abs(np.asarray(out_f32, np.int32) - ref.astype(np.int32)))) <= 1

    # 2) Default bf16 MXU path (pixels may differ by ~+-1; check shape/dtype only).
    out_bf16 = jax.block_until_ready(resize_with_pad(img, (16, 16), float_output=False))
    assert out_bf16.shape == (16, 16, 4) and out_bf16.dtype == jnp.uint8

    # 3) Batched input: leading grid axis reuses the VMEM-resident weights across images.
    imgs = jnp.stack([img, 255.0 - img])
    out_b = jax.block_until_ready(resize_with_pad(imgs, (16, 16), float_output=False))
    assert out_b.shape == (2, 16, 16, 4) and out_b.dtype == jnp.uint8
    assert int(np.max(np.abs(np.asarray(out_b[0], np.int32)
                             - np.asarray(out_bf16, np.int32)))) <= 1

    # 4) "No resize" branch (both ratios > 1): pure centered zero pad, float output,
    #    must reproduce the input bit-exactly in the center.
    out_pad = jax.block_until_ready(resize_with_pad(img, (48, 40), float_output=True))
    assert out_pad.shape == (40, 48, 4) and out_pad.dtype == jnp.float32
    assert jnp.array_equal(out_pad[8:32, 8:40, :], img)
    assert float(jnp.abs(out_pad[:8]).max()) == 0.0

    # 5) Pad-only branch with uint8 output.
    out_pad_u8 = jax.block_until_ready(resize_with_pad(img, (48, 40), float_output=False))
    assert out_pad_u8.shape == (40, 48, 4) and out_pad_u8.dtype == jnp.uint8
    assert np.array_equal(np.asarray(out_pad_u8)[8:32, 8:40, :], img_np.astype(np.uint8))

    print("KERNEL_OK")
</pallas_src>

<mosaic_0001>
module attributes {stable_mosaic.version = 11 : i64} {
  func.func @_resize_pad_kernel(%arg0: i32, %arg1: i32, %arg2: i32, %arg3: memref<1x24x32xf32, #tpu.memory_space<vmem>>, %arg4: memref<16x24xf32, #tpu.memory_space<vmem>>, %arg5: memref<32x16xf32, #tpu.memory_space<vmem>>, %arg6: memref<1x16x16xi8, #tpu.memory_space<vmem>>, %arg7: memref<16x16xf32, #tpu.memory_space<vmem>>) attributes {dimension_semantics = [#tpu.dimension_semantics<parallel>, #tpu.dimension_semantics<parallel>, #tpu.dimension_semantics<arbitrary>], iteration_bounds = array<i64: 4, 1, 1>, scalar_prefetch = 0 : i64, scratch_operands = 1 : i64, tpu.core_type = #tpu.core_type<tc>, window_params = [{transform_indices = @transform_0, window_bounds = array<i64: 1, 24, 32>}, {transform_indices = @transform_1, window_bounds = array<i64: 16, 24>}, {transform_indices = @transform_2, window_bounds = array<i64: 32, 16>}, {transform_indices = @transform_3, window_bounds = array<i64: 1, 16, 16>}]} {
    %c0_i32 = arith.constant 0 : i32
    %0 = arith.cmpi eq, %arg2, %c0_i32 : i32
    %1 = arith.extui %0 : i1 to i32
    %c0_i32_0 = arith.constant 0 : i32
    %2 = arith.cmpi ne, %1, %c0_i32_0 : i32
    scf.if %2 {
      %cst_14 = arith.constant 0.000000e+00 : f32
      %15 = vector.broadcast %cst_14 : f32 to vector<16x16xf32>
      %c0_15 = arith.constant 0 : index
      %c0_16 = arith.constant 0 : index
      %16 = vector.load %arg7[%c0_15, %c0_16] : memref<16x16xf32, #tpu.memory_space<vmem>>, vector<16x16xf32>
      tpu.vector_store %arg7[%c0_15, %c0_16], %15 {strides = array<i32>} : memref<16x16xf32, #tpu.memory_space<vmem>>, vector<16x16xf32>,
    } else {
    }
    %c0 = arith.constant 0 : index
    %c0_1 = arith.constant 0 : index
    %c0_2 = arith.constant 0 : index
    %3 = vector.load %arg3[%c0, %c0_1, %c0_2] : memref<1x24x32xf32, #tpu.memory_space<vmem>>, vector<1x24x32xf32>
    %4 = vector.shape_cast %3 : vector<1x24x32xf32> to vector<24x32xf32>
    %c0_3 = arith.constant 0 : index
    %c0_4 = arith.constant 0 : index
    %5 = vector.load %arg4[%c0_3, %c0_4] : memref<16x24xf32, #tpu.memory_space<vmem>>, vector<16x24xf32>
    %c0_5 = arith.constant 0 : index
    %c0_6 = arith.constant 0 : index
    %6 = vector.load %arg5[%c0_5, %c0_6] : memref<32x16xf32, #tpu.memory_space<vmem>>, vector<32x16xf32>
    %cst = arith.constant dense<0.000000e+00> : vector<24x16xf32>
    %7 = tpu.matmul %4, %6, %cst {dimension_numbers = #tpu.dot_dimension_numbers<[1], [0], [0], [1], [0, 0, 1, 1], [], []>} : vector<24x32xf32>, vector<32x16xf32>, vector<24x16xf32> -> vector<24x16xf32>
    %c0_7 = arith.constant 0 : index
    %c0_8 = arith.constant 0 : index
    %8 = vector.load %arg7[%c0_7, %c0_8] : memref<16x16xf32, #tpu.memory_space<vmem>>, vector<16x16xf32>
    %cst_9 = arith.constant dense<0.000000e+00> : vector<16x16xf32>
    %9 = tpu.matmul %5, %7, %cst_9 {dimension_numbers = #tpu.dot_dimension_numbers<[1], [0], [0], [1], [0, 0, 1, 1], [], []>} : vector<16x24xf32>, vector<24x16xf32>, vector<16x16xf32> -> vector<16x16xf32>
    %10 = arith.addf %8, %9 : vector<16x16xf32>
    %c0_10 = arith.constant 0 : index
    %c0_11 = arith.constant 0 : index
    %11 = vector.load %arg7[%c0_10, %c0_11] : memref<16x16xf32, #tpu.memory_space<vmem>>, vector<16x16xf32>
    tpu.vector_store %arg7[%c0_10, %c0_11], %10 {strides = array<i32>} : memref<16x16xf32, #tpu.memory_space<vmem>>, vector<16x16xf32>,
    %c0_i32_12 = arith.constant 0 : i32
    %12 = arith.cmpi eq, %arg2, %c0_i32_12 : i32
    %13 = arith.extui %12 : i1 to i32
    %c0_i32_13 = arith.constant 0 : i32
    %14 = arith.cmpi ne, %13, %c0_i32_13 : i32
    scf.if %14 {
      %c0_14 = arith.constant 0 : index
      %c0_15 = arith.constant 0 : index
      %15 = vector.load %arg7[%c0_14, %c0_15] : memref<16x16xf32, #tpu.memory_space<vmem>>, vector<16x16xf32>
      %cst_16 = arith.constant 0.000000e+00 : f32
      %cst_17 = arith.constant 2.550000e+02 : f32
      %16 = vector.broadcast %cst_16 : f32 to vector<16x16xf32>
      %17 = arith.maximumf %16, %15 : vector<16x16xf32>
      %18 = vector.broadcast %cst_17 : f32 to vector<16x16xf32>
      %19 = arith.minimumf %18, %17 : vector<16x16xf32>
      %20 = math.roundeven %19 : vector<16x16xf32>
      %21 = arith.fptosi %20 : vector<16x16xf32> to vector<16x16xi32>
      %22 = arith.trunci %21 : vector<16x16xi32> to vector<16x16xi8>
      %c0_18 = arith.constant 0 : index
      %c0_19 = arith.constant 0 : index
      %c0_20 = arith.constant 0 : index
      %23 = vector.load %arg6[%c0_18, %c0_19, %c0_20] : memref<1x16x16xi8, #tpu.memory_space<vmem>>, vector<1x16x16xi8>
      %24 = vector.shape_cast %23 : vector<1x16x16xi8> to vector<16x16xi8>
      %25 = vector.shape_cast %22 : vector<16x16xi8> to vector<1x16x16xi8>
      tpu.vector_store %arg6[%c0_18, %c0_19, %c0_20], %25 {strides = array<i32>} : memref<1x16x16xi8, #tpu.memory_space<vmem>>, vector<1x16x16xi8>,
    } else {
    }
    return
  }
  func.func @transform_0(%arg0: i32, %arg1: i32, %arg2: i32) -> (i32, i32, i32) {
    %c0_i32 = arith.constant 0 : i32
    %c0_i32_0 = arith.constant 0 : i32
    return %arg0, %c0_i32, %arg2 : i32, i32, i32
  }
  func.func @transform_1(%arg0: i32, %arg1: i32, %arg2: i32) -> (i32, i32) {
    %c0_i32 = arith.constant 0 : i32
    %c0_i32_0 = arith.constant 0 : i32
    return %arg1, %c0_i32 : i32, i32
  }
  func.func @transform_2(%arg0: i32, %arg1: i32, %arg2: i32) -> (i32, i32) {
    %c0_i32 = arith.constant 0 : i32
    %c0_i32_0 = arith.constant 0 : i32
    return %arg2, %c0_i32 : i32, i32
  }
  func.func @transform_3(%arg0: i32, %arg1: i32, %arg2: i32) -> (i32, i32, i32) {
    %c0_i32 = arith.constant 0 : i32
    %c0_i32_0 = arith.constant 0 : i32
    return %arg0, %arg1, %c0_i32 : i32, i32, i32
  }
}

</mosaic_0001>

<llo_original>
// kernel: tpu_custom_call.1
$region0: #{tpu_custom_call.1}
  #allocation0 [shape = 'u32[]', space=smem, size = 0x4, offset = 0x4, fixed_abs, tag = 'smem constant byte address 0x4 - core index']
  #allocation1 [shape = 'u32[144,128]{1,0:T(1,128)}', space=vmem, size = 0x12000, scoped, tag = 'internal scratch']
  #allocation2 [shape = 'f32[16,16]{1,0:T(8,128)}', space=vmem, size = 0x2000, scoped, tag = 'scratch operand']
  %s0 = inlined_call_operand.hbm [shape: f32[4,24,32], index: 0, kind: input, shape index: {}]
  %s1 = inlined_call_operand.vmem [shape: f32[16,24], index: 1, kind: input, shape index: {}]
  %s2 = inlined_call_operand.vmem [shape: f32[32,16], index: 2, kind: input, shape index: {}]
  %s3 = inlined_call_operand.hbm [shape: u8[4,16,16], index: 3, kind: output, shape index: {}]
  %s4 = sld [smem:[#allocation0]]
  $region57: #{tpu_custom_call.1} parent=0
    _
  %s6 = ssub.s32 1, %s4
  %s7 = scalar_select 0, %s6, %s4
  $region1: #{tpu_custom_call.1} parent=0
    #allocation3 [shape = 'u8[24576]{0}', space=vmem, size = 0x6000, scoped, tag = 'input window, operand 0']
    #allocation4 [shape = 's32[2]{0}', space=sflag, size = 0x8, scoped, tag = 'scoped memory for tpu_custom_call.1']
    #allocation5 [shape = 's32[2]{0}', space=sflag, size = 0x8, scoped, tag = 'scoped memory for tpu_custom_call.1']
    #allocation6 [shape = 'u8[4096]{0}', space=vmem, size = 0x1000, scoped, tag = 'output window, operand 0']
    %8 = vsyncpa [#allocation4], 0
    %s9 = scalar_lea.sflag [#allocation4], 1
    %10 = vsyncpa %s9, 0
    %11 = vsyncpa [#allocation5], 0
    %s12 = scalar_lea.sflag [#allocation5], 1
    %13 = vsyncpa %s12, 0
    loop: start=0, step=1, limit=6
    $region2: #{tpu_custom_call.1} parent=1 // loop_pre_header
      _
    $region3: #{tpu_custom_call.1} parent=1 // loop_header
      %s15 = sphi 0, %s19
      %p16 = scmp.ge.s32.totalorder %s15, 6
      %s22 = sphi 0, %s41
      %s23 = sphi 0, %s37
      %s24 = sphi 0, %s33
      %s25 = sphi 0, %s22
      %s26 = sphi 0, %s23
      %s27 = sphi 0, %s24
      %s28 = sphi 0, %s25
      %s29 = sphi 0, %s26
      %s30 = sphi 0, %s27
      %s46 = sphi 0, %s48
      %s49 = sphi 0, %s46
      %s50 = sphi 0, %s49
      %s66 = sphi 0, %s50
      %s72 = sphi 0, %s74
      %s75 = sphi 0, %s72
      %s76 = sphi 0, %s75
      %s92 = sphi 0, %s76
      %s98 = sphi 0, %s100
      %s101 = sphi 0, %s98
      %s102 = sphi 0, %s101
      %s118 = sphi 0, %s102
      %s126 = sphi 0, %s128
      %s129 = sphi 0, %s126
      %s130 = sphi 0, %s129
      %s146 = sphi 0, %s130
    $region4: #{tpu_custom_call.1} parent=1 // loop_header_branch
      %18 = sbr.rel (%p16) target = $region8
    $region5: #{tpu_custom_call.1} parent=1 // loop_body
      %s20 = ssub.s32 %s15, 1
      %s21 = ssub.s32 %s15, 2
      %s31 = sadd.s32 1, %s24
      %p32 = scmp.ge.s32.totalorder %s31, 1
      %s33 = scalar_select %p32, 0, %s31
      %s34 = sadd.s32 1, %s23
      %s35 = scalar_select %p32, %s34, %s23
      %p36 = scmp.ge.s32.totalorder %s35, 1
      %s37 = scalar_select %p36, 0, %s35
      %s38 = sadd.s32 1, %s22
      %s39 = scalar_select %p36, %s38, %s22
      %p40 = scmp.ge.s32.totalorder %s39, 4
      %s41 = scalar_select %p40, 0, %s39
      %s42 = ssub.s32 %s22, %s41
      %s43 = ssub.s32 %s24, %s33
      %s44 = sor.u32 %s42, %s43
      %p45 = scmp.eq.s32.totalorder %s44, 0
      %s47 = sadd.s32 %s46, 1
      %s48 = scalar_select %p45, %s46, %s47
      %p51 = pneg %p45
      %p52 = scmp.eq.s32.totalorder %s15, 3
      %p53 = por %p51, %p52
      %p54 = scmp.ne.s32.totalorder %s46, %s49
      %p55 = scmp.eq.s32.totalorder %s15, 0
      %p56 = por %p54, %p55
      %p57 = scmp.ne.s32.totalorder %s46, %s49
      %p58 = scmp.eq.s32.totalorder %s20, 3
      %p59 = por %p57, %p58
      %p60 = scmp.ne.s32.totalorder %s49, %s50
      %p61 = scmp.eq.s32.totalorder %s20, 0
      %p62 = por %p60, %p61
      %p63 = scmp.ne.s32.totalorder %s49, %s50
      %p64 = scmp.eq.s32.totalorder %s21, 3
      %p65 = por %p63, %p64
      %p67 = scmp.ne.s32.totalorder %s50, %s66
      %p68 = scmp.eq.s32.totalorder %s21, 0
      %p69 = por %p67, %p68
      %s70 = ssub.s32 %s23, %s37
      %p71 = scmp.eq.s32.totalorder %s70, 0
      %s73 = sadd.s32 %s72, 1
      %s74 = scalar_select %p71, %s72, %s73
      %p77 = pneg %p71
      %p78 = scmp.eq.s32.totalorder %s15, 3
      %p79 = por %p77, %p78
      %p80 = scmp.ne.s32.totalorder %s72, %s75
      %p81 = scmp.eq.s32.totalorder %s15, 0
      %p82 = por %p80, %p81
      %p83 = scmp.ne.s32.totalorder %s72, %s75
      %p84 = scmp.eq.s32.totalorder %s20, 3
      %p85 = por %p83, %p84
      %p86 = scmp.ne.s32.totalorder %s75, %s76
      %p87 = scmp.eq.s32.totalorder %s20, 0
      %p88 = por %p86, %p87
      %p89 = scmp.ne.s32.totalorder %s75, %s76
      %p90 = scmp.eq.s32.totalorder %s21, 3
      %p91 = por %p89, %p90
      %p93 = scmp.ne.s32.totalorder %s76, %s92
      %p94 = scmp.eq.s32.totalorder %s21, 0
      %p95 = por %p93, %p94
      %s96 = ssub.s32 %s24, %s33
      %p97 = scmp.eq.s32.totalorder %s96, 0
      %s99 = sadd.s32 %s98, 1
      %s100 = scalar_select %p97, %s98, %s99
      %p103 = pneg %p97
      %p104 = scmp.eq.s32.totalorder %s15, 3
      %p105 = por %p103, %p104
      %p106 = scmp.ne.s32.totalorder %s98, %s101
      %p107 = scmp.eq.s32.totalorder %s15, 0
      %p108 = por %p106, %p107
      %p109 = scmp.ne.s32.totalorder %s98, %s101
      %p110 = scmp.eq.s32.totalorder %s20, 3
      %p111 = por %p109, %p110
      %p112 = scmp.ne.s32.totalorder %s101, %s102
      %p113 = scmp.eq.s32.totalorder %s20, 0
      %p114 = por %p112, %p113
      %p115 = scmp.ne.s32.totalorder %s101, %s102
      %p116 = scmp.eq.s32.totalorder %s21, 3
      %p117 = por %p115, %p116
      %p119 = scmp.ne.s32.totalorder %s102, %s118
      %p120 = scmp.eq.s32.totalorder %s21, 0
      %p121 = por %p119, %p120
      %s122 = ssub.s32 %s22, %s41
      %s123 = ssub.s32 %s23, %s37
      %s124 = sor.u32 %s122, %s123
      %p125 = scmp.eq.s32.totalorder %s124, 0
      %s127 = sadd.s32 %s126, 1
      %s128 = scalar_select %p125, %s126, %s127
      %p131 = pneg %p125
      %p132 = scmp.eq.s32.totalorder %s15, 3
      %p133 = por %p131, %p132
      %p134 = scmp.ne.s32.totalorder %s126, %s129
      %p135 = scmp.eq.s32.totalorder %s15, 0
      %p136 = por %p134, %p135
      %p137 = scmp.ne.s32.totalorder %s126, %s129
      %p138 = scmp.eq.s32.totalorder %s20, 3
      %p139 = por %p137, %p138
      %p140 = scmp.ne.s32.totalorder %s129, %s130
      %p141 = scmp.eq.s32.totalorder %s20, 0
      %p142 = por %p140, %p141
      %p143 = scmp.ne.s32.totalorder %s129, %s130
      %p144 = scmp.eq.s32.totalorder %s21, 3
      %p145 = por %p143, %p144
      %p147 = scmp.ne.s32.totalorder %s130, %s146
      %p148 = scmp.eq.s32.totalorder %s21, 0
      %p149 = por %p147, %p148
      %p150 = scmp.le.s32.totalorder 1, %s15
      %p151 = scmp.lt.s32.totalorder %s15, 5
      %p152 = pnand %p150, %p151
      %p153 = pneg %p152
      // Predicated region
      $region9: #{tpu_custom_call.1} parent=5 // pred_check
        _
      $region10: #{tpu_custom_call.1} parent=5 // pred_check_branch
        %155 = sbr.rel (%p152) target = $region12
      $region11: #{tpu_custom_call.1} parent=5 // pred_region
        %s156 = ssub.s32 %s15, 1
        // Predicated region
        $region13: #{tpu_custom_call.1} parent=11 // pred_check
          %p157 = pneg %p88
        $region14: #{tpu_custom_call.1} parent=11 // pred_check_branch
          %159 = sbr.rel (%p157) target = $region16
        $region15: #{tpu_custom_call.1} parent=11 // pred_region
          %s160 = smul.u32 2, %s26
          %p161 = scmp.lt.s32.totalorder %s160, 1
          %s162 = scalar_select %p161, %s160, 1
          %s163 = smul.addr %s162, 8
          %s164 = scalar_lea.vmem %s1, %s163
          %s165 = smul.u32 2, %s26
        $region16: #{tpu_custom_call.1} parent=11 // pred_fallthru
          _
        // Predicated region
        $region17: #{tpu_custom_call.1} parent=11 // pred_check
          %p166 = pneg %p114
        $region18: #{tpu_custom_call.1} parent=11 // pred_check_branch
          %168 = sbr.rel (%p166) target = $region20
        $region19: #{tpu_custom_call.1} parent=11 // pred_region
          %s169 = smul.u32 4, %s27
          %p170 = scmp.lt.s32.totalorder %s169, 3
          %s171 = scalar_select %p170, %s169, 3
          %s172 = smul.addr %s171, 8
          %s173 = scalar_lea.vmem %s2, %s172
          %s174 = smul.u32 4, %s27
        $region20: #{tpu_custom_call.1} parent=11 // pred_fallthru
          _
      $region12: #{tpu_custom_call.1} parent=5 // pred_fallthru
        _
      %p175 = scmp.lt.s32.totalorder %s15, 4
      // Predicated region
      $region21: #{tpu_custom_call.1} parent=5 // pred_check
        %p176 = pneg %p175
      $region22: #{tpu_custom_call.1} parent=5 // pred_check_branch
        %178 = sbr.rel (%p176) target = $region24
      $region23: #{tpu_custom_call.1} parent=5 // pred_region
        // Predicated region
        $region25: #{tpu_custom_call.1} parent=23 // pred_check
          %p179 = pneg %p56
        $region26: #{tpu_custom_call.1} parent=23 // pred_check_branch
          %181 = sbr.rel (%p179) target = $region28
        $region27: #{tpu_custom_call.1} parent=23 // pred_region
          %s182 = sand.u32 %s46, 1
          %s183 = scalar_lea.sflag [#allocation4], %s182
          %s184 = sand.u32 %s46, 1
          %s185 = smul.addr %s184, 24
          %s186 = scalar_lea.vmem [#allocation3], %s185
          %s188 = ssub.s32 384, 384
          %189 = vsyncadd %s183, %s188
          %s190 = smul.addr %s22, 3
          %s191 = sadd.s32 %s24, %s190
          %s192 = smul.addr %s191, 128
          %s193 = scalar_lea.hbm %s0, %s192
          %s194 = sshll.u32 %s186, 4
          %s195 = int_to_ptr.vmem [resolvable:$true] %s194
          %200 = dma.hbm_to_vmem [thread:$0]  %s193, 384, %s195, %s183, 128, 128, 8
        $region28: #{tpu_custom_call.1} parent=23 // pred_fallthru
          _
      $region24: #{tpu_custom_call.1} parent=5 // pred_fallthru
        _
      %p201 = scmp.le.s32.totalorder 1, %s15
      %p202 = scmp.lt.s32.totalorder %s15, 5
      %p203 = pnand %p201, %p202
      %p204 = pneg %p203
      // Predicated region
      $region29: #{tpu_custom_call.1} parent=5 // pred_check
        _
      $region30: #{tpu_custom_call.1} parent=5 // pred_check_branch
        %206 = sbr.rel (%p203) target = $region32
      $region31: #{tpu_custom_call.1} parent=5 // pred_region
        %s207 = ssub.s32 %s15, 1
        %s208 = sand.u32 %s49, 1
        %s209 = scalar_lea.sflag [#allocation4], %s208
        %s210 = sand.u32 %s49, 1
        %s211 = smul.addr %s210, 24
        %s212 = scalar_lea.vmem [#allocation3], %s211
        // Predicated region
        $region33: #{tpu_custom_call.1} parent=31 // pred_check
          %p213 = pneg %p62
        $region34: #{tpu_custom_call.1} parent=31 // pred_check_branch
          %215 = sbr.rel (%p213) target = $region36
        $region35: #{tpu_custom_call.1} parent=31 // pred_region
          %216 = dma.done %s209, 384
        $region36: #{tpu_custom_call.1} parent=31 // pred_fallthru
          _
        %s217 = sand.u32 %s49, 1
        %s218 = scalar_lea.sflag [#allocation4], %s217
        %s219 = sand.u32 %s49, 1
        %s220 = smul.addr %s219, 24
        %s221 = scalar_lea.vmem [#allocation3], %s220
        %p222 = pneg %p62
        %p223 = pneg %p59
        %s224 = smul.u32 2, %s26
        %p225 = scmp.lt.s32.totalorder %s224, 1
        %s226 = scalar_select %p225, %s224, 1
        %s227 = smul.addr %s226, 8
        %s228 = scalar_lea.vmem %s1, %s227
        %p229 = pneg %p88
        %p230 = pneg %p85
        %s231 = smul.u32 4, %s27
        %p232 = scmp.lt.s32.totalorder %s231, 3
        %s233 = scalar_select %p232, %s231, 3
        %s234 = smul.addr %s233, 8
        %s235 = scalar_lea.vmem %s2, %s234
        %p236 = pneg %p114
        %p237 = pneg %p111
        %p238 = pneg %p142
        %p239 = pneg %p139
        %s240 = sand.u32 %s129, 1
        %s241 = scalar_lea.sflag [#allocation5], %s240
        %s242 = sand.u32 %s129, 1
        %s243 = smul.addr %s242, 4
        %s244 = scalar_lea.vmem [#allocation6], %s243
        %s245 = smul.u32 2, %s26
        %p246 = scmp.lt.s32.totalorder %s245, 1
        %s247 = scalar_select %p246, %s245, 1
        %s248 = smul.addr %s247, 8
        %s249 = scalar_lea.vmem %s1, %s248
        %s250 = smul.u32 2, %s26
        %s251 = smul.u32 4, %s27
        %p252 = scmp.lt.s32.totalorder %s251, 3
        %s253 = scalar_select %p252, %s251, 3
        %s254 = smul.addr %s253, 8
        %s255 = scalar_lea.vmem %s2, %s254
        %s256 = smul.u32 4, %s27
        %s257 = smul.u32 2, %s26
        %p258 = scmp.eq.s32.totalorder %s27, 0
        // Predicated region
        $region37: #{tpu_custom_call.1} parent=31 // pred_check
          %p259 = pneg %p258
        $region38: #{tpu_custom_call.1} parent=31 // pred_check_branch
          %261 = sbr.rel (%p259) target = $region40
        $region39: #{tpu_custom_call.1} parent=31 // pred_region
          %vm262 = vcmask 130048
          %263 = vst.msk [vmem:[#allocation2] sm:$0xff] %vm262, 0.0
          %264 = vst.msk [vmem:[#allocation2 + $0x8] sm:$0xff] %vm262, 0.0
        $region40: #{tpu_custom_call.1} parent=31 // pred_fallthru
          _
        %v265 = vld [vmem:[%s212] sm:$0xff]
        %v266 = vld [vmem:[%s212 + $0x8] sm:$0xff]
        %v267 = vld [vmem:[%s212 + $0x10] sm:$0xff]
        %v268 = vld [vmem:[%s249] sm:$0xff]
        %v269 = vld [vmem:[%s249 + $0x8] sm:$0xff]
        %v270 = vld [vmem:[%s255] sm:$0xff]
        %v271 = vld [vmem:[%s255 + $0x8] sm:$0xff]
        %v272 = vld [vmem:[%s255 + $0x10] sm:$0xff]
        %v273 = vld [vmem:[%s255 + $0x18] sm:$0xff]
        %vm274 = vcmask 261120
        %v276 = vsel %vm274, %v265, 0
        %v279 = vsel %vm274, %v266, 0
        %v282 = vsel %vm274, %v267, 0
        %284 = vmatprep.subr.mxu0 0.0
        %285 = vmatpush1.msra.mxu0 %v270
        %286 = vmatprep.subr.mxu0 0.0
        %287 = vmatpush1.msra.mxu0 %v271
        %288 = vmatprep.subr.mxu0 0.0
        %289 = vmatpush1.msra.mxu0 %v272
        %290 = vmatprep.subr.mxu0 0.0
        %291 = vmatpush1.msra.mxu0 %v273
        %292 = vmatprep.subr.mxu0 0.0
        %293 = vmatpush1.msra.mxu0 0.0
        %294 = vmatprep.subr.mxu0 0.0
        %295 = vmatpush1.msra.mxu0 0.0
        %296 = vmatprep.subr.mxu0 0.0
        %297 = vmatpush1.msra.mxu0 0.0
        %298 = vmatprep.subr.mxu0 0.0
        %299 = vmatpush1.msra.mxu0 0.0
        %300 = vmatprep.subr.mxu0 0.0
        %301 = vmatpush1.msra.mxu0 0.0
        %302 = vmatprep.subr.mxu0 0.0
        %303 = vmatpush1.msra.mxu0 0.0
        %304 = vmatprep.subr.mxu0 0.0
        %305 = vmatpush1.msra.mxu0 0.0
        %306 = vmatprep.subr.mxu0 0.0
        %307 = vmatpush1.msra.mxu0 0.0
        %308 = vmatprep.subr.mxu0 0.0
        %309 = vmatpush1.msra.mxu0 0.0
        %310 = vmatprep.subr.mxu0 0.0
        %311 = vmatpush1.msra.mxu0 0.0
        %312 = vmatprep.subr.mxu0 0.0
        %313 = vmatpush1.msra.mxu0 0.0
        %314 = vmatprep.subr.mxu0 0.0
        %315 = vmatpush1.msra.mxu0 0.0
        %316 = vmatprep.subr.mxu0 0.0
        %317 = vmatpush1.msra.mxu0 0.0
        %318 = vmatprep.subr.mxu0 0.0
        %319 = vmatpush1.msra.mxu0 0.0
        %320 = vmatprep.subr.mxu0 0.0
        %321 = vmatpush1.msra.mxu0 0.0
        %322 = vmatprep.subr.mxu0 0.0
        %323 = vmatpush1.msra.mxu0 0.0
        %324 = vmatprep.subr.mxu0 0.0
        %325 = vmatpush1.msra.mxu0 0.0
        %326 = vmatprep.subr.mxu0 0.0
        %327 = vmatpush1.msra.mxu0 0.0
        %328 = vmatprep.subr.mxu0 0.0
        %329 = vmatpush1.msra.mxu0 0.0
        %330 = vmatprep.subr.mxu0 0.0
        %331 = vmatpush1.msra.mxu0 0.0
        %332 = vmatprep.subr.mxu0 0.0
        %333 = vmatpush1.msra.mxu0 0.0
        %334 = vmatprep.subr.mxu0 0.0
        %335 = vmatpush1.msra.mxu0 0.0
        %336 = vmatprep.subr.mxu0 0.0
        %337 = vmatpush1.msra.mxu0 0.0
        %338 = vmatprep.subr.mxu0 0.0
        %339 = vmatpush1.msra.mxu0 0.0
        %340 = vmatprep.subr.mxu0 0.0
        %341 = vmatpush1.msra.mxu0 0.0
        %342 = vmatprep.subr.mxu0 0.0
        %343 = vmatpush1.msra.mxu0 0.0
        %344 = vmatprep.subr.mxu0 0.0
        %345 = vmatpush1.msra.mxu0 0.0
        %346 = vmatprep.subr.mxu0 0.0
        %347 = vmatpush1.msra.mxu0 0.0
        %348 = vmatprep.mubr.f32.mxu0 0.0
        %349 = vmatmul.mubr.f32.gmra.mrb[0].mxu0 %v276
        %v350 = vpop.f32.mrb[0].mxu0
        %v351 = vadd.f32 0.0, %v350
        %v352 = vpop.f32.mrb[0].mxu0
        %353 = vmatprep.mubr.f32.mxu0 0.0
        %354 = vmatmul.mubr.f32.gmra.mrb[0].mxu0 %v279
        %v355 = vpop.f32.mrb[0].mxu0
        %v356 = vadd.f32 0.0, %v355
        %v357 = vpop.f32.mrb[0].mxu0
        %358 = vmatprep.mubr.f32.mxu0 0.0
        %359 = vmatmul.mubr.f32.gmra.mrb[0].mxu0 %v282
        %v360 = vpop.f32.mrb[0].mxu0
        %v361 = vadd.f32 0.0, %v360
        %v362 = vpop.f32.mrb[0].mxu0
        %363 = vdwg.mxu0
        %v364 = vld [vmem:[#allocation2] sm:$0xff]
        %v365 = vld [vmem:[#allocation2 + $0x8] sm:$0xff]
        %vm366 = vcmask 195584
        %v368 = vsel %vm366, %v268, 0
        %v371 = vsel %vm366, %v269, 0
        %373 = vmatprep.subr.mxu0 0.0
        %374 = vmatpush1.msra.mxu0 %v351
        %375 = vmatprep.subr.mxu0 0.0
        %376 = vmatpush1.msra.mxu0 %v356
        %377 = vmatprep.subr.mxu0 0.0
        %378 = vmatpush1.msra.mxu0 %v361
        %379 = vmatprep.subr.mxu0 0.0
        %380 = vmatpush1.msra.mxu0 0.0
        %381 = vmatprep.subr.mxu0 0.0
        %382 = vmatpush1.msra.mxu0 0.0
        %383 = vmatprep.subr.mxu0 0.0
        %384 = vmatpush1.msra.mxu0 0.0
        %385 = vmatprep.subr.mxu0 0.0
        %386 = vmatpush1.msra.mxu0 0.0
        %387 = vmatprep.subr.mxu0 0.0
        %388 = vmatpush1.msra.mxu0 0.0
        %389 = vmatprep.subr.mxu0 0.0
        %390 = vmatpush1.msra.mxu0 0.0
        %391 = vmatprep.subr.mxu0 0.0
        %392 = vmatpush1.msra.mxu0 0.0
        %393 = vmatprep.subr.mxu0 0.0
        %394 = vmatpush1.msra.mxu0 0.0
        %395 = vmatprep.subr.mxu0 0.0
        %396 = vmatpush1.msra.mxu0 0.0
        %397 = vmatprep.subr.mxu0 0.0
        %398 = vmatpush1.msra.mxu0 0.0
        %399 = vmatprep.subr.mxu0 0.0
        %400 = vmatpush1.msra.mxu0 0.0
        %401 = vmatprep.subr.mxu0 0.0
        %402 = vmatpush1.msra.mxu0 0.0
        %403 = vmatprep.subr.mxu0 0.0
        %404 = vmatpush1.msra.mxu0 0.0
        %405 = vmatprep.subr.mxu0 0.0
        %406 = vmatpush1.msra.mxu0 0.0
        %407 = vmatprep.subr.mxu0 0.0
        %408 = vmatpush1.msra.mxu0 0.0
        %409 = vmatprep.subr.mxu0 0.0
        %410 = vmatpush1.msra.mxu0 0.0
        %411 = vmatprep.subr.mxu0 0.0
        %412 = vmatpush1.msra.mxu0 0.0
        %413 = vmatprep.subr.mxu0 0.0
        %414 = vmatpush1.msra.mxu0 0.0
        %415 = vmatprep.subr.mxu0 0.0
        %416 = vmatpush1.msra.mxu0 0.0
        %417 = vmatprep.subr.mxu0 0.0
        %418 = vmatpush1.msra.mxu0 0.0
        %419 = vmatprep.subr.mxu0 0.0
        %420 = vmatpush1.msra.mxu0 0.0
        %421 = vmatprep.subr.mxu0 0.0
        %422 = vmatpush1.msra.mxu0 0.0
        %423 = vmatprep.subr.mxu0 0.0
        %424 = vmatpush1.msra.mxu0 0.0
        %425 = vmatprep.subr.mxu0 0.0
        %426 = vmatpush1.msra.mxu0 0.0
        %427 = vmatprep.subr.mxu0 0.0
        %428 = vmatpush1.msra.mxu0 0.0
        %429 = vmatprep.subr.mxu0 0.0
        %430 = vmatpush1.msra.mxu0 0.0
        %431 = vmatprep.subr.mxu0 0.0
        %432 = vmatpush1.msra.mxu0 0.0
        %433 = vmatprep.subr.mxu0 0.0
        %434 = vmatpush1.msra.mxu0 0.0
        %435 = vmatprep.subr.mxu0 0.0
        %436 = vmatpush1.msra.mxu0 0.0
        %437 = vmatprep.mubr.f32.mxu0 0.0
        %438 = vmatmul.mubr.f32.gmra.mrb[0].mxu0 %v368
        %v439 = vpop.f32.mrb[0].mxu0
        %v440 = vadd.f32 0.0, %v439
        %v441 = vpop.f32.mrb[0].mxu0
        %442 = vmatprep.mubr.f32.mxu0 0.0
        %443 = vmatmul.mubr.f32.gmra.mrb[0].mxu0 %v371
        %v444 = vpop.f32.mrb[0].mxu0
        %v445 = vadd.f32 0.0, %v444
        %v446 = vpop.f32.mrb[0].mxu0
        %447 = vdwg.mxu0
        %v448 = vadd.f32 %v364, %v440
        %v449 = vadd.f32 %v365, %v445
        %vm450 = vcmask 130048
        %451 = vst.msk [vmem:[#allocation2] sm:$0xff] %vm450, %v448
        %452 = vst.msk [vmem:[#allocation2 + $0x8] sm:$0xff] %vm450, %v449
        // Predicated region
        $region41: #{tpu_custom_call.1} parent=31 // pred_check
          %p453 = pneg %p258
        $region42: #{tpu_custom_call.1} parent=31 // pred_check_branch
          %455 = sbr.rel (%p453) target = $region44
        $region43: #{tpu_custom_call.1} parent=31 // pred_region
          %v456 = vld [vmem:[#allocation2] sm:$0xff]
          %v457 = vld [vmem:[#allocation2 + $0x8] sm:$0xff]
          %v458 = vmax.f32 %v456, 0.0
          %v459 = vmax.f32 %v457, 0.0
          %v460 = vmin.f32 %v458, 255.0
          %v461 = vmin.f32 %v459, 255.0
          %v462 = vcvt.f32.s32.ties.to.even %v460
          %v463 = vcvt.f32.s32.ties.to.even %v461
          %v464 = vpack.c.b16 %v462, %v462
          %v465 = vpack.c.b8 %v464, %v464
          %v466 = vpack.c.b16 %v463, %v463
          %v467 = vpack.c.b8 %v466, %v466
          %vm468 = vcmask 123904
          %469 = vst.msk [vmem:[%s244] sm:$0x3] %vm468, %v465
          %470 = vst.msk [vmem:[%s244 + $0x2] sm:$0x3] %vm468, %v467
        $region44: #{tpu_custom_call.1} parent=31 // pred_fallthru
          _
        %s471 = sand.u32 %s129, 1
        %s472 = scalar_lea.sflag [#allocation5], %s471
        %s473 = sand.u32 %s129, 1
        %s474 = smul.addr %s473, 4
        %s475 = scalar_lea.vmem [#allocation6], %s474
        // Predicated region
        $region45: #{tpu_custom_call.1} parent=31 // pred_check
          %p476 = pneg %p139
        $region46: #{tpu_custom_call.1} parent=31 // pred_check_branch
          %478 = sbr.rel (%p476) target = $region48
        $region47: #{tpu_custom_call.1} parent=31 // pred_region
          %s479 = smul.u32 2, %s26
          %s481 = ssub.s32 64, 64
          %482 = vsyncadd %s472, %s481
          %s483 = smul.addr %s25, 2
          %s484 = sadd.s32 %s479, %s483
          %s485 = smul.addr %s484, 32
          %s486 = scalar_lea.hbm %s3, %s485
          %s487 = sshll.u32 %s475, 4
          %s488 = int_to_ptr.vmem [resolvable:$true] %s487
          %493 = dma.vmem_to_hbm [thread:$0]  %s488, 64, %s486, %s472, 32, 32, 2
        $region48: #{tpu_custom_call.1} parent=31 // pred_fallthru
          _
      $region32: #{tpu_custom_call.1} parent=5 // pred_fallthru
        _
      %p494 = scmp.le.s32.totalorder 2, %s15
      // Predicated region
      $region49: #{tpu_custom_call.1} parent=5 // pred_check
        %p495 = pneg %p494
      $region50: #{tpu_custom_call.1} parent=5 // pred_check_branch
        %497 = sbr.rel (%p495) target = $region52
      $region51: #{tpu_custom_call.1} parent=5 // pred_region
        %s498 = ssub.s32 %s15, 2
        // Predicated region
        $region53: #{tpu_custom_call.1} parent=51 // pred_check
          %p499 = pneg %p145
        $region54: #{tpu_custom_call.1} parent=51 // pred_check_branch
          %501 = sbr.rel (%p499) target = $region56
        $region55: #{tpu_custom_call.1} parent=51 // pred_region
          %s502 = sand.u32 %s130, 1
          %s503 = scalar_lea.sflag [#allocation5], %s502
          %s504 = sand.u32 %s130, 1
          %s505 = smul.addr %s504, 4
          %s506 = scalar_lea.vmem [#allocation6], %s505
          %507 = dma.done %s503, 64
        $region56: #{tpu_custom_call.1} parent=51 // pred_fallthru
          _
      $region52: #{tpu_custom_call.1} parent=5 // pred_fallthru
        _
    $region6: #{tpu_custom_call.1} parent=1 // loop_footer
      %s19 = sadd.s32 1, %s15
    $region7: #{tpu_custom_call.1} parent=1 // loop_footer_branch
      %14 = sbr.rel target = $region3
    $region8: #{tpu_custom_call.1} parent=1 // loop_exit
      _
    %508 = vsyncpa [#allocation4], 1
    %s509 = scalar_lea.sflag [#allocation4], 1
    %510 = vsyncpa %s509, 1
    %511 = vsyncpa [#allocation5], 1
    %s512 = scalar_lea.sflag [#allocation5], 1
    %513 = vsyncpa %s512, 1

</llo_original>
